<compile_context>
chip_gen: v6e
topology: v6e:2x2x1
jax: 0.10.0
libtpu: 0.0.40
codegen_flags: <defaults>
</compile_context>

<pallas_src>
import functools

import jax
import jax.numpy as jnp
from jax import lax
from jax.experimental import pallas as pl
from jax.experimental.pallas import tpu as pltpu


def _low_per_loss_kernel(org_ref, adv_ref, out_ref, *, w_img, rows_total,
                         block_rows, scale, beta):
    # org_ref / adv_ref: (block_rows, 2*w_img) blocks of the row-pair view
    #   (row r = [image row 2r | image row 2r+1] concatenated).
    # out_ref: (1, 8, 128) per-step partial-sum slab (full, lane-dense store).
    f32 = jnp.float32

    # Vertical (row-pair) sums of the difference: left half + right half.
    d_top = org_ref[:, :w_img].astype(f32) - adv_ref[:, :w_img].astype(f32)
    d_bot = org_ref[:, w_img:].astype(f32) - adv_ref[:, w_img:].astype(f32)
    u = d_top + d_bot                                  # (block_rows, w_img)

    # Horizontal (column-pair) sums: lane j pairs columns (j, j+1); only even
    # j correspond to real 2x2 blocks (masked below).
    s4 = u[:, :-1] + u[:, 1:]                          # (block_rows, w_img-1)

    # Haar DWT_tiny -> IDWT_tiny of (org - adv)  ==  2x2 block mean.
    m = s4 * 0.25
    am = jnp.abs(m)
    # SmoothL1 with constants folded (no per-element divide).
    l = jnp.where(am < beta, (0.5 / beta) * am * am, am - 0.5 * beta)

    col = lax.broadcasted_iota(jnp.int32, l.shape, 1)
    row = lax.broadcasted_iota(jnp.int32, l.shape, 0) + pl.program_id(0) * block_rows
    keep = jnp.logical_and((col & 1) == 0, row < rows_total)

    partial = scale * jnp.sum(jnp.where(keep, l, 0.0))
    out_ref[...] = jnp.broadcast_to(partial, out_ref.shape).astype(f32)


def _pick_block_rows(rows, lane_elems, itemsize, target_bytes=2 * 1024 * 1024):
    # Sublane granularity by dtype packing: f32 -> 8, bf16/f16 -> 16, int8 -> 32.
    mult = 8 * max(1, 4 // max(1, itemsize))
    trb = max(mult, target_bytes // max(1, lane_elems * itemsize))
    trb -= trb % mult
    trb = max(mult, trb)
    if trb >= rows:
        return rows          # single block; block dim == full dim is allowed
    return trb


def low_per_loss(org, adv, weight=1.0, reduction="sum", beta=1.0,
                 block_rows=None):
    # TODO(synk): only the module's default reduction='sum' path is implemented
    # ('none'/'mean' would need a per-pixel output instead of a scalar).
    assert reduction == "sum"
    assert org.shape == adv.shape
    N, C, H, W = org.shape
    assert H % 2 == 0 and W % 2 == 0, "Haar tiny DWT path expects even H and W"

    rows = N * C * (H // 2)
    lanes = 2 * W
    # Layout-free 2-D views; no transpose / pad / dtype cast in the wrapper.
    ov = org.reshape(rows, lanes)
    av = adv.reshape(rows, lanes)

    itemsize = max(jnp.dtype(org.dtype).itemsize, jnp.dtype(adv.dtype).itemsize)
    if block_rows is None:
        block_rows = _pick_block_rows(rows, lanes, itemsize)
    n_blocks = pl.cdiv(rows, block_rows)

    kernel = functools.partial(
        _low_per_loss_kernel,
        w_img=W, rows_total=rows, block_rows=block_rows,
        scale=4.0 * float(weight), beta=float(beta))

    partials = pl.pallas_call(
        kernel,
        out_shape=jax.ShapeDtypeStruct((n_blocks, 8, 128), jnp.float32),
        grid=(n_blocks,),
        in_specs=[
            pl.BlockSpec((block_rows, lanes), lambda i: (i, 0)),
            pl.BlockSpec((block_rows, lanes), lambda i: (i, 0)),
        ],
        out_specs=pl.BlockSpec((1, 8, 128), lambda i: (i, 0, 0)),
        compiler_params=pltpu.CompilerParams(
            dimension_semantics=("parallel",),
            vmem_limit_bytes=32 * 1024 * 1024,
        ),
    )(ov, av)
    return jnp.sum(partials[:, 0, 0])


def _reference_loss(org, adv, beta=1.0):
    # Pure-JAX reference of the PyTorch module (for correctness check).
    org = org.astype(jnp.float32)
    adv = adv.astype(jnp.float32)

    def ll_recon(x):
        N, C, H, W = x.shape
        m = x.reshape(N, C, H // 2, 2, W // 2, 2).mean(axis=(3, 5))
        return jnp.repeat(jnp.repeat(m, 2, axis=2), 2, axis=3)

    d = jnp.abs(ll_recon(org) - ll_recon(adv))
    l = jnp.where(d < beta, 0.5 * d * d / beta, d - 0.5 * beta)
    return jnp.sum(l)


if __name__ == "__main__":
    key = jax.random.PRNGKey(0)
    k1, k2, k3, k4 = jax.random.split(key, 4)

    # Test 1: default shapes, auto-picked (single fat) block.
    N, C, H, W = 2, 4, 16, 16
    org = jax.random.uniform(k1, (N, C, H, W), dtype=jnp.float32)
    adv = org + 0.5 * jax.random.normal(k2, (N, C, H, W), dtype=jnp.float32)
    loss = jax.block_until_ready(low_per_loss(org, adv, weight=1.0))
    ref = _reference_loss(org, adv)
    assert jnp.allclose(loss, ref, rtol=1e-5, atol=1e-5), (loss, ref)

    # Test 2: multi-step grid with a ragged (masked) last block.
    N2, C2, H2, W2 = 1, 3, 10, 12
    org2 = jax.random.uniform(k3, (N2, C2, H2, W2), dtype=jnp.float32)
    adv2 = org2 + 0.5 * jax.random.normal(k4, (N2, C2, H2, W2), dtype=jnp.float32)
    loss2 = jax.block_until_ready(low_per_loss(org2, adv2, block_rows=8))
    ref2 = _reference_loss(org2, adv2)
    assert jnp.allclose(loss2, ref2, rtol=1e-5, atol=1e-5), (loss2, ref2)

    # Test 3: native bf16 inputs are DMA'd as bf16 and upcast in-kernel.
    orgb = org.astype(jnp.bfloat16)
    advb = adv.astype(jnp.bfloat16)
    loss3 = jax.block_until_ready(low_per_loss(orgb, advb))
    ref3 = _reference_loss(orgb, advb)
    assert jnp.allclose(loss3, ref3, rtol=1e-4, atol=1e-4), (loss3, ref3)

    print("KERNEL_OK")
</pallas_src>

<mosaic_0001>
module attributes {stable_mosaic.version = 11 : i64} {
  func.func @_low_per_loss_kernel(%arg0: i32, %arg1: memref<64x32xf32, #tpu.memory_space<vmem>>, %arg2: memref<64x32xf32, #tpu.memory_space<vmem>>, %arg3: memref<1x8x128xf32, #tpu.memory_space<vmem>>) attributes {dimension_semantics = [#tpu.dimension_semantics<parallel>], iteration_bounds = array<i64: 1>, scalar_prefetch = 0 : i64, scratch_operands = 0 : i64, tpu.core_type = #tpu.core_type<tc>, window_params = [{transform_indices = @transform_0, window_bounds = array<i64: 64, 32>}, {transform_indices = @transform_1, window_bounds = array<i64: 64, 32>}, {transform_indices = @transform_2, window_bounds = array<i64: 1, 8, 128>}]} {
    %c0 = arith.constant 0 : index
    %c0_0 = arith.constant 0 : index
    %0 = vector.load %arg1[%c0, %c0_0] : memref<64x32xf32, #tpu.memory_space<vmem>>, vector<64x16xf32>
    %c0_1 = arith.constant 0 : index
    %c0_2 = arith.constant 0 : index
    %1 = vector.load %arg2[%c0_1, %c0_2] : memref<64x32xf32, #tpu.memory_space<vmem>>, vector<64x16xf32>
    %2 = arith.subf %0, %1 : vector<64x16xf32>
    %c0_3 = arith.constant 0 : index
    %c16 = arith.constant 16 : index
    %3 = vector.load %arg1[%c0_3, %c16] : memref<64x32xf32, #tpu.memory_space<vmem>>, vector<64x16xf32>
    %c0_4 = arith.constant 0 : index
    %c16_5 = arith.constant 16 : index
    %4 = vector.load %arg2[%c0_4, %c16_5] : memref<64x32xf32, #tpu.memory_space<vmem>>, vector<64x16xf32>
    %5 = arith.subf %3, %4 : vector<64x16xf32>
    %6 = arith.addf %2, %5 : vector<64x16xf32>
    %7 = vector.extract_strided_slice %6 {offsets = [0, 0], sizes = [64, 15], strides = [1, 1]} : vector<64x16xf32> to vector<64x15xf32>
    %8 = vector.extract_strided_slice %6 {offsets = [0, 1], sizes = [64, 15], strides = [1, 1]} : vector<64x16xf32> to vector<64x15xf32>
    %9 = arith.addf %7, %8 : vector<64x15xf32>
    %cst = arith.constant 2.500000e-01 : f32
    %10 = vector.broadcast %cst : f32 to vector<64x15xf32>
    %11 = arith.mulf %9, %10 : vector<64x15xf32>
    %12 = math.absf %11 : vector<64x15xf32>
    %cst_6 = arith.constant 1.000000e+00 : f32
    %13 = vector.broadcast %cst_6 : f32 to vector<64x15xf32>
    %14 = arith.cmpf olt, %12, %13 : vector<64x15xf32>
    %cst_7 = arith.constant 5.000000e-01 : f32
    %15 = vector.broadcast %cst_7 : f32 to vector<64x15xf32>
    %16 = arith.mulf %15, %12 : vector<64x15xf32>
    %17 = arith.mulf %16, %12 : vector<64x15xf32>
    %cst_8 = arith.constant 5.000000e-01 : f32
    %18 = vector.broadcast %cst_8 : f32 to vector<64x15xf32>
    %19 = arith.subf %12, %18 : vector<64x15xf32>
    %20 = arith.select %14, %17, %19 : vector<64x15xi1>, vector<64x15xf32>
    %21 = tpu.iota {dimensions = array<i32: 1>} : vector<64x15xi32>
    %22 = tpu.iota {dimensions = array<i32: 0>} : vector<64x15xi32>
    %c64_i32 = arith.constant 64 : i32
    %23 = arith.muli %arg0, %c64_i32 : i32
    %24 = vector.broadcast %23 : i32 to vector<64x15xi32>
    %25 = arith.addi %22, %24 : vector<64x15xi32>
    %c1_i32 = arith.constant 1 : i32
    %26 = vector.broadcast %c1_i32 : i32 to vector<64x15xi32>
    %27 = arith.andi %21, %26 : vector<64x15xi32>
    %c0_i32 = arith.constant 0 : i32
    %28 = vector.broadcast %c0_i32 : i32 to vector<64x15xi32>
    %29 = arith.cmpi eq, %27, %28 : vector<64x15xi32>
    %c64_i32_9 = arith.constant 64 : i32
    %30 = vector.broadcast %c64_i32_9 : i32 to vector<64x15xi32>
    %31 = arith.cmpi slt, %25, %30 : vector<64x15xi32>
    %32 = arith.andi %29, %31 : vector<64x15xi1>
    %cst_10 = arith.constant 0.000000e+00 : f32
    %33 = vector.broadcast %cst_10 : f32 to vector<64x15xf32>
    %34 = arith.select %32, %20, %33 : vector<64x15xi1>, vector<64x15xf32>
    %35 = vector.shape_cast %34 : vector<64x15xf32> to vector<1x64x15xf32>
    %cst_11 = arith.constant dense<0.000000e+00> : vector<1xf32>
    %36 = vector.multi_reduction <add>, %35, %cst_11 [1, 2] : vector<1x64x15xf32> to vector<1xf32>
    %37 = vector.shape_cast %36 : vector<1xf32> to vector<1x1x1xf32>
    %38 = vector.extract %37[0, 0, 0] : f32 from vector<1x1x1xf32>
    %cst_12 = arith.constant 4.000000e+00 : f32
    %39 = arith.mulf %cst_12, %38 : f32
    %40 = vector.broadcast %39 : f32 to vector<1x8x128xf32>
    %c0_13 = arith.constant 0 : index
    %c0_14 = arith.constant 0 : index
    %c0_15 = arith.constant 0 : index
    %41 = vector.load %arg3[%c0_13, %c0_14, %c0_15] : memref<1x8x128xf32, #tpu.memory_space<vmem>>, vector<1x8x128xf32>
    tpu.vector_store %arg3[%c0_13, %c0_14, %c0_15], %40 {strides = array<i32>} : memref<1x8x128xf32, #tpu.memory_space<vmem>>, vector<1x8x128xf32>,
    return
  }
  func.func @transform_0(%arg0: i32) -> (i32, i32) {
    %c0_i32 = arith.constant 0 : i32
    %c0_i32_0 = arith.constant 0 : i32
    return %arg0, %c0_i32 : i32, i32
  }
  func.func @transform_1(%arg0: i32) -> (i32, i32) {
    %c0_i32 = arith.constant 0 : i32
    %c0_i32_0 = arith.constant 0 : i32
    return %arg0, %c0_i32 : i32, i32
  }
  func.func @transform_2(%arg0: i32) -> (i32, i32, i32) {
    %c0_i32 = arith.constant 0 : i32
    %c0_i32_0 = arith.constant 0 : i32
    %c0_i32_1 = arith.constant 0 : i32
    return %arg0, %c0_i32, %c0_i32_0 : i32, i32, i32
  }
}

</mosaic_0001>

<llo_original>
// kernel: tpu_custom_call.1
$region0: #{tpu_custom_call.1}
  #allocation0 [shape = 'u32[]', space=smem, size = 0x4, offset = 0x4, fixed_abs, tag = 'smem constant byte address 0x4 - core index']
  #allocation1 [shape = 'u32[144,128]{1,0:T(1,128)}', space=vmem, size = 0x12000, scoped, tag = 'internal scratch']
  %s0 = inlined_call_operand.vmem [shape: f32[64,32], index: 0, kind: input, shape index: {}]
  %s1 = inlined_call_operand.vmem [shape: f32[64,32], index: 1, kind: input, shape index: {}]
  %s2 = inlined_call_operand.hbm [shape: f32[1,8,128], index: 2, kind: output, shape index: {}]
  %s3 = sld [smem:[#allocation0]]
  $region18: #{tpu_custom_call.1} parent=0
    _
  %s5 = ssub.s32 1, %s3
  %s6 = scalar_select 0, %s5, %s3
  $region1: #{tpu_custom_call.1} parent=0
    #allocation2 [shape = 'u8[4096]{0}', space=vmem, size = 0x1000, scoped, tag = 'output window, operand 0, single buffered']
    #allocation3 [shape = 's32[1]{0}', space=sflag, size = 0x4, scoped, tag = 'scoped memory for tpu_custom_call.1']
    %7 = vsyncpa [#allocation3], 0
    // Predicated region
    $region2: #{tpu_custom_call.1} parent=1 // pred_check
      _
    $region3: #{tpu_custom_call.1} parent=1 // pred_check_branch
      %9 = sbr.rel (0) target = $region5
    $region4: #{tpu_custom_call.1} parent=1 // pred_region
      _
    $region5: #{tpu_custom_call.1} parent=1 // pred_fallthru
      _
    // Predicated region
    $region6: #{tpu_custom_call.1} parent=1 // pred_check
      _
    $region7: #{tpu_custom_call.1} parent=1 // pred_check_branch
      %11 = sbr.rel (0) target = $region9
    $region8: #{tpu_custom_call.1} parent=1 // pred_region
      _
    $region9: #{tpu_custom_call.1} parent=1 // pred_fallthru
      _
    %v12 = vld [vmem:[%s0] sm:$0xff]
    %v13 = vld [vmem:[%s0 + $0x8] sm:$0xff]
    %v14 = vld [vmem:[%s0 + $0x10] sm:$0xff]
    %v15 = vld [vmem:[%s0 + $0x18] sm:$0xff]
    %v16 = vld [vmem:[%s0 + $0x20] sm:$0xff]
    %v17 = vld [vmem:[%s0 + $0x28] sm:$0xff]
    %v18 = vld [vmem:[%s0 + $0x30] sm:$0xff]
    %v19 = vld [vmem:[%s0 + $0x38] sm:$0xff]
    %v20 = vld [vmem:[%s1] sm:$0xff]
    %v21 = vld [vmem:[%s1 + $0x8] sm:$0xff]
    %v22 = vld [vmem:[%s1 + $0x10] sm:$0xff]
    %v23 = vld [vmem:[%s1 + $0x18] sm:$0xff]
    %v24 = vld [vmem:[%s1 + $0x20] sm:$0xff]
    %v25 = vld [vmem:[%s1 + $0x28] sm:$0xff]
    %v26 = vld [vmem:[%s1 + $0x30] sm:$0xff]
    %v27 = vld [vmem:[%s1 + $0x38] sm:$0xff]
    %v28 = vsub.f32 %v12, %v20
    %v29 = vsub.f32 %v13, %v21
    %v30 = vsub.f32 %v14, %v22
    %v31 = vsub.f32 %v15, %v23
    %v32 = vsub.f32 %v16, %v24
    %v33 = vsub.f32 %v17, %v25
    %v34 = vsub.f32 %v18, %v26
    %v35 = vsub.f32 %v19, %v27
    %44 = vrot.lane.b32.xlu0 %v28, 112
    %v45 = vpop.permute.xlu0 %44
    %46 = vrot.lane.b32.xlu0 %v29, 112
    %v47 = vpop.permute.xlu0 %46
    %48 = vrot.lane.b32.xlu0 %v30, 112
    %v49 = vpop.permute.xlu0 %48
    %50 = vrot.lane.b32.xlu0 %v31, 112
    %v51 = vpop.permute.xlu0 %50
    %52 = vrot.lane.b32.xlu0 %v32, 112
    %v53 = vpop.permute.xlu0 %52
    %54 = vrot.lane.b32.xlu0 %v33, 112
    %v55 = vpop.permute.xlu0 %54
    %56 = vrot.lane.b32.xlu0 %v34, 112
    %v57 = vpop.permute.xlu0 %56
    %58 = vrot.lane.b32.xlu0 %v35, 112
    %v59 = vpop.permute.xlu0 %58
    %v68 = vadd.f32 %v28, %v45
    %v69 = vadd.f32 %v29, %v47
    %v70 = vadd.f32 %v30, %v49
    %v71 = vadd.f32 %v31, %v51
    %v72 = vadd.f32 %v32, %v53
    %v73 = vadd.f32 %v33, %v55
    %v74 = vadd.f32 %v34, %v57
    %v75 = vadd.f32 %v35, %v59
    %84 = vrot.lane.b32.xlu0 %v68, 127
    %v85 = vpop.permute.xlu0 %84
    %86 = vrot.lane.b32.xlu0 %v69, 127
    %v87 = vpop.permute.xlu0 %86
    %88 = vrot.lane.b32.xlu0 %v70, 127
    %v89 = vpop.permute.xlu0 %88
    %90 = vrot.lane.b32.xlu0 %v71, 127
    %v91 = vpop.permute.xlu0 %90
    %92 = vrot.lane.b32.xlu0 %v72, 127
    %v93 = vpop.permute.xlu0 %92
    %94 = vrot.lane.b32.xlu0 %v73, 127
    %v95 = vpop.permute.xlu0 %94
    %96 = vrot.lane.b32.xlu0 %v74, 127
    %v97 = vpop.permute.xlu0 %96
    %98 = vrot.lane.b32.xlu0 %v75, 127
    %v99 = vpop.permute.xlu0 %98
    %v108 = vadd.f32 %v68, %v85
    %v109 = vadd.f32 %v69, %v87
    %v110 = vadd.f32 %v70, %v89
    %v111 = vadd.f32 %v71, %v91
    %v112 = vadd.f32 %v72, %v93
    %v113 = vadd.f32 %v73, %v95
    %v114 = vadd.f32 %v74, %v97
    %v115 = vadd.f32 %v75, %v99
    %v116 = vmul.f32 %v108, 0.25
    %v117 = vmul.f32 %v109, 0.25
    %v118 = vmul.f32 %v110, 0.25
    %v119 = vmul.f32 %v111, 0.25
    %v120 = vmul.f32 %v112, 0.25
    %v121 = vmul.f32 %v113, 0.25
    %v122 = vmul.f32 %v114, 0.25
    %v123 = vmul.f32 %v115, 0.25
    %v124 = vand.u32 2147483647, %v116
    %v125 = vand.u32 2147483647, %v117
    %v126 = vand.u32 2147483647, %v118
    %v127 = vand.u32 2147483647, %v119
    %v128 = vand.u32 2147483647, %v120
    %v129 = vand.u32 2147483647, %v121
    %v130 = vand.u32 2147483647, %v122
    %v131 = vand.u32 2147483647, %v123
    %vm132 = vcmp.lt.f32.partialorder %v124, 1.0
    %vm133 = vcmp.lt.f32.partialorder %v125, 1.0
    %vm134 = vcmp.lt.f32.partialorder %v126, 1.0
    %vm135 = vcmp.lt.f32.partialorder %v127, 1.0
    %vm136 = vcmp.lt.f32.partialorder %v128, 1.0
    %vm137 = vcmp.lt.f32.partialorder %v129, 1.0
    %vm138 = vcmp.lt.f32.partialorder %v130, 1.0
    %vm139 = vcmp.lt.f32.partialorder %v131, 1.0
    %v140 = vmul.f32 %v124, 0.5
    %v141 = vmul.f32 %v125, 0.5
    %v142 = vmul.f32 %v126, 0.5
    %v143 = vmul.f32 %v127, 0.5
    %v144 = vmul.f32 %v128, 0.5
    %v145 = vmul.f32 %v129, 0.5
    %v146 = vmul.f32 %v130, 0.5
    %v147 = vmul.f32 %v131, 0.5
    %v148 = vmul.f32 %v140, %v124
    %v149 = vmul.f32 %v141, %v125
    %v150 = vmul.f32 %v142, %v126
    %v151 = vmul.f32 %v143, %v127
    %v152 = vmul.f32 %v144, %v128
    %v153 = vmul.f32 %v145, %v129
    %v154 = vmul.f32 %v146, %v130
    %v155 = vmul.f32 %v147, %v131
    %v156 = vsub.f32 %v124, 0.5
    %v157 = vsub.f32 %v125, 0.5
    %v158 = vsub.f32 %v126, 0.5
    %v159 = vsub.f32 %v127, 0.5
    %v160 = vsub.f32 %v128, 0.5
    %v161 = vsub.f32 %v129, 0.5
    %v162 = vsub.f32 %v130, 0.5
    %v163 = vsub.f32 %v131, 0.5
    %v164 = vsel %vm132, %v148, %v156
    %v165 = vsel %vm133, %v149, %v157
    %v166 = vsel %vm134, %v150, %v158
    %v167 = vsel %vm135, %v151, %v159
    %v168 = vsel %vm136, %v152, %v160
    %v169 = vsel %vm137, %v153, %v161
    %v170 = vsel %vm138, %v154, %v162
    %v171 = vsel %vm139, %v155, %v163
    %v172 = vlaneseq
    %v173 = vand.u32 %v172, 127
    %v174 = vlaneseq
    %v175 = vshrl.u32 %v174, 7
    %v176 = vadd.s32 %v175, 8
    %v177 = vadd.s32 %v175, 16
    %v178 = vadd.s32 %v175, 24
    %v179 = vadd.s32 %v175, 32
    %v180 = vadd.s32 %v175, 40
    %v181 = vadd.s32 %v175, 48
    %v182 = vadd.s32 %v175, 56
    %s183 = smul.u32 0, 64
    %v184 = vstv %s183
    %v185 = vadd.s32 %v175, %v184
    %v186 = vadd.s32 %v176, %v184
    %v187 = vadd.s32 %v177, %v184
    %v188 = vadd.s32 %v178, %v184
    %v189 = vadd.s32 %v179, %v184
    %v190 = vadd.s32 %v180, %v184
    %v191 = vadd.s32 %v181, %v184
    %v192 = vadd.s32 %v182, %v184
    %v193 = vand.u32 %v173, 1
    %vm194 = vcmp.eq.s32.totalorder %v193, 0
    %vm195 = vcmp.lt.s32.totalorder %v185, 64
    %vm196 = vcmp.lt.s32.totalorder %v186, 64
    %vm197 = vcmp.lt.s32.totalorder %v187, 64
    %vm198 = vcmp.lt.s32.totalorder %v188, 64
    %vm199 = vcmp.lt.s32.totalorder %v189, 64
    %vm200 = vcmp.lt.s32.totalorder %v190, 64
    %vm201 = vcmp.lt.s32.totalorder %v191, 64
    %vm202 = vcmp.lt.s32.totalorder %v192, 64
    %vm203 = vmand %vm194, %vm195
    %vm204 = vmand %vm194, %vm196
    %vm205 = vmand %vm194, %vm197
    %vm206 = vmand %vm194, %vm198
    %vm207 = vmand %vm194, %vm199
    %vm208 = vmand %vm194, %vm200
    %vm209 = vmand %vm194, %vm201
    %vm210 = vmand %vm194, %vm202
    %v211 = vsel %vm203, %v164, 0.0
    %v212 = vsel %vm204, %v165, 0.0
    %v213 = vsel %vm205, %v166, 0.0
    %v214 = vsel %vm206, %v167, 0.0
    %v215 = vsel %vm207, %v168, 0.0
    %v216 = vsel %vm208, %v169, 0.0
    %v217 = vsel %vm209, %v170, 0.0
    %v218 = vsel %vm210, %v171, 0.0
    %vm219 = vcmask 121856
    %v220 = vsel %vm219, %v211, 0.0
    %v221 = vsel %vm219, %v212, 0.0
    %v222 = vadd.f32 %v220, %v221
    %v223 = vsel %vm219, %v213, 0.0
    %v224 = vadd.f32 %v222, %v223
    %v225 = vsel %vm219, %v214, 0.0
    %v226 = vadd.f32 %v224, %v225
    %v227 = vsel %vm219, %v215, 0.0
    %v228 = vadd.f32 %v226, %v227
    %v229 = vsel %vm219, %v216, 0.0
    %v230 = vadd.f32 %v228, %v229
    %v231 = vsel %vm219, %v217, 0.0
    %v232 = vadd.f32 %v230, %v231
    %v233 = vsel %vm219, %v218, 0.0
    %v234 = vadd.f32 %v232, %v233
    %235 = vadd.xlane.f32.xlu0 %v234
    %v236 = vpop.xlane.xlu0 %235
    %v237 = vrot.slane %v236, 4
    %v238 = vadd.f32 %v236, %v237
    %v239 = vrot.slane %v238, 2
    %v240 = vadd.f32 %v238, %v239
    %v241 = vrot.slane %v240, 1
    %v242 = vadd.f32 %v240, %v241
    %s243 = vtos %v242
    %s244 = smul.f32 %s243, 4.0
    %v245 = vstv %s244
    %246 = vst [vmem:[#allocation2] sm:$0xff] %v245
    // Predicated region
    $region10: #{tpu_custom_call.1} parent=1 // pred_check
      _
    $region11: #{tpu_custom_call.1} parent=1 // pred_check_branch
      %248 = sbr.rel (0) target = $region13
    $region12: #{tpu_custom_call.1} parent=1 // pred_region
      %s250 = ssub.s32 128, 128
      %251 = vsyncadd [#allocation3], %s250
      %s253 = sshll.u32 [#allocation2], 4
      %s254 = int_to_ptr.vmem [resolvable:$true] %s253
      %256 = dma.vmem_to_hbm [thread:$0]  %s254, 128, %s2, [#allocation3]
    $region13: #{tpu_custom_call.1} parent=1 // pred_fallthru
      _
    // Predicated region
    $region14: #{tpu_custom_call.1} parent=1 // pred_check
      _
    $region15: #{tpu_custom_call.1} parent=1 // pred_check_branch
      %258 = sbr.rel (0) target = $region17
    $region16: #{tpu_custom_call.1} parent=1 // pred_region
      %259 = dma.done [#allocation3], 128
    $region17: #{tpu_custom_call.1} parent=1 // pred_fallthru
      _
    %260 = vsyncpa [#allocation3], 1

</llo_original>
